<compile_context>
chip_gen: v6e
topology: v6e:2x2x1
jax: 0.10.0
libtpu: 0.0.40
codegen_flags: <defaults>
</compile_context>

<pallas_src>
import functools

import jax
import jax.numpy as jnp
from jax.experimental import pallas as pl
from jax.experimental.pallas import tpu as pltpu


def _output_layers_kernel(x_ref, gamma_ref, beta_ref, w_ref, b_ref, o_ref,
                          y_scratch, *, eps):
    # x_ref:     (TB, D)   row tile of the (flattened, padded) input
    # gamma_ref: (1, D)    LayerNorm scale
    # beta_ref:  (1, D)    LayerNorm shift
    # w_ref:     (D, TN)   Linear weight tile (native dtype)
    # b_ref:     (1, TN)   Linear bias tile
    # o_ref:     (TB, TN)  output tile
    # y_scratch: (TB, D)   cached LayerNorm+ReLU activations (weight dtype)

    # LayerNorm + ReLU only for the first output-column tile of each row tile.
    @pl.when(pl.program_id(1) == 0)
    def _():
        x = x_ref[...].astype(jnp.float32)
        d = x.shape[-1]
        inv_d = 1.0 / d
        s1 = jnp.sum(x, axis=-1, keepdims=True)
        s2 = jnp.sum(x * x, axis=-1, keepdims=True)
        mean = s1 * inv_d
        var = jnp.maximum(s2 * inv_d - mean * mean, 0.0)
        inv_std = jax.lax.rsqrt(var + eps)
        y = (x - mean) * inv_std
        y = y * gamma_ref[...].astype(jnp.float32) + beta_ref[...].astype(jnp.float32)
        y = jnp.maximum(y, 0.0)                      # ReLU
        y_scratch[...] = y.astype(y_scratch.dtype)   # cast once to MXU dtype

    # MXU matmul in the weight's native dtype, f32 accumulation, f32 bias add.
    out = jnp.dot(y_scratch[...], w_ref[...], preferred_element_type=jnp.float32)
    out = out + b_ref[...].astype(jnp.float32)
    o_ref[...] = out.astype(o_ref.dtype)


def _pick_row_tile(rows):
    # 256 rows fills the 256x256 MXU on v6e/v7x; 128 is fine for v5e's 128x128.
    if rows >= 256:
        return 256
    if rows >= 128:
        return 128
    # Small problems: one tile, rounded up to a sublane multiple.
    return max(8, ((rows + 7) // 8) * 8)


def _pick_col_tile(d_model, output_size, w_itemsize):
    if output_size % 128 != 0:
        return output_size  # full-extent block is always legal
    # Per-buffer weight-tile budget: keeps the double-buffered weight stream
    # comfortably inside v5e's 16 MiB default scoped VMEM and v7x's 64 MiB.
    budget = 8 * 1024 * 1024
    if d_model * output_size * w_itemsize <= budget:
        return output_size  # whole weight resident, DMA'd exactly once
    tn = 512
    while tn > 128 and (output_size % tn != 0 or d_model * tn * w_itemsize > budget):
        tn //= 2
    if output_size % tn != 0:
        tn = 128
    return tn


def output_layers(x, gamma, beta, weight, bias, *, eps=1e-5):
    """Equivalent to torch: Linear(ReLU(LayerNorm(x))).

    x:      (..., d_model)
    gamma:  (d_model,)               LayerNorm weight
    beta:   (d_model,)               LayerNorm bias
    weight: (d_model, output_size)   (transposed vs. torch Linear.weight)
    bias:   (output_size,)
    returns (..., output_size)
    """
    d_model = x.shape[-1]
    output_size = weight.shape[-1]
    lead = x.shape[:-1]

    rows = 1
    for d in lead:
        rows *= d
    x2 = x.reshape(rows, d_model)

    tb = _pick_row_tile(rows)
    tn = _pick_col_tile(d_model, output_size, weight.dtype.itemsize)

    # Pad rows up to a multiple of the row tile (sliced off after the call).
    padded_rows = pl.cdiv(rows, tb) * tb
    if padded_rows != rows:
        x2 = jnp.pad(x2, ((0, padded_rows - rows), (0, 0)))

    grid = (padded_rows // tb, output_size // tn)

    gamma2 = gamma.reshape(1, d_model)
    beta2 = beta.reshape(1, d_model)
    bias2 = bias.reshape(1, output_size)

    # VMEM budget estimate (double-buffered operands + LN scratch) + headroom.
    xb = x2.dtype.itemsize
    wb = weight.dtype.itemsize
    ob = x.dtype.itemsize
    est = 2 * (tb * d_model * xb + d_model * tn * wb + tb * tn * ob
               + 2 * d_model * gamma.dtype.itemsize + tn * bias.dtype.itemsize)
    est += tb * d_model * wb  # LN/ReLU scratch
    vmem_limit = min(60 * 1024 * 1024, max(32 * 1024 * 1024, int(est * 1.5) + (2 << 20)))

    kernel = functools.partial(_output_layers_kernel, eps=eps)

    out2 = pl.pallas_call(
        kernel,
        out_shape=jax.ShapeDtypeStruct((padded_rows, output_size), x.dtype),
        grid_spec=pltpu.PrefetchScalarGridSpec(
            num_scalar_prefetch=0,
            grid=grid,
            in_specs=[
                pl.BlockSpec((tb, d_model), lambda i, j: (i, 0)),   # x rows
                pl.BlockSpec((1, d_model), lambda i, j: (0, 0)),    # gamma
                pl.BlockSpec((1, d_model), lambda i, j: (0, 0)),    # beta
                pl.BlockSpec((d_model, tn), lambda i, j: (0, j)),   # weight
                pl.BlockSpec((1, tn), lambda i, j: (0, j)),         # bias
            ],
            out_specs=pl.BlockSpec((tb, tn), lambda i, j: (i, j)),
            scratch_shapes=[pltpu.VMEM((tb, d_model), weight.dtype)],
        ),
        compiler_params=pltpu.CompilerParams(
            # j must be "arbitrary": all j tiles of a row tile reuse the LN
            # scratch computed at j == 0.  i stays "parallel" for megacore.
            dimension_semantics=("parallel", "arbitrary"),
            vmem_limit_bytes=vmem_limit,
        ),
    )(x2, gamma2, beta2, weight, bias2)

    out2 = out2[:rows]
    return out2.reshape(*lead, output_size)


def _reference(x, gamma, beta, weight, bias, eps=1e-5):
    mean = x.mean(-1, keepdims=True)
    var = ((x - mean) ** 2).mean(-1, keepdims=True)
    xn = (x - mean) / jnp.sqrt(var + eps) * gamma + beta
    return jnp.maximum(xn, 0.0) @ weight + bias


if __name__ == "__main__":
    key = jax.random.PRNGKey(0)

    # Test 1: the module's nominal small shapes.
    B, S, d_model, output_size = 2, 8, 32, 16
    k1, k2, k3, k4, k5, k6 = jax.random.split(key, 6)
    x = jax.random.normal(k1, (B, S, d_model), dtype=jnp.float32)
    gamma = jax.random.normal(k2, (d_model,), dtype=jnp.float32) * 0.1 + 1.0
    beta = jax.random.normal(k3, (d_model,), dtype=jnp.float32) * 0.1
    weight = jax.random.normal(k4, (d_model, output_size), dtype=jnp.float32) * 0.1
    bias = jax.random.normal(k5, (output_size,), dtype=jnp.float32) * 0.1

    y = output_layers(x, gamma, beta, weight, bias)
    jax.block_until_ready(y)
    y_ref = _reference(x, gamma, beta, weight, bias)
    assert y.shape == (B, S, output_size), y.shape
    assert jnp.allclose(y, y_ref, atol=1e-4, rtol=1e-4), "mismatch vs reference (test 1)"

    # Test 2: awkward row count (exercises row padding) + 128-multiple output.
    B2, S2, d_model2, out2 = 4, 5, 64, 256
    ka, kb, kc, kd, ke = jax.random.split(k6, 5)
    x2 = jax.random.normal(ka, (B2, S2, d_model2), dtype=jnp.float32)
    g2 = jax.random.normal(kb, (d_model2,), dtype=jnp.float32) * 0.1 + 1.0
    b2 = jax.random.normal(kc, (d_model2,), dtype=jnp.float32) * 0.1
    w2 = jax.random.normal(kd, (d_model2, out2), dtype=jnp.float32) * 0.1
    bi2 = jax.random.normal(ke, (out2,), dtype=jnp.float32) * 0.1

    y2 = output_layers(x2, g2, b2, w2, bi2)
    jax.block_until_ready(y2)
    y2_ref = _reference(x2, g2, b2, w2, bi2)
    assert y2.shape == (B2, S2, out2), y2.shape
    assert jnp.allclose(y2, y2_ref, atol=1e-4, rtol=1e-4), "mismatch vs reference (test 2)"

    print("KERNEL_OK")
</pallas_src>

<mosaic_0001>
module attributes {stable_mosaic.version = 11 : i64} {
  func.func @_output_layers_kernel(%arg0: i32, %arg1: i32, %arg2: memref<16x32xf32, #tpu.memory_space<vmem>>, %arg3: memref<1x32xf32, #tpu.memory_space<vmem>>, %arg4: memref<1x32xf32, #tpu.memory_space<vmem>>, %arg5: memref<32x16xf32, #tpu.memory_space<vmem>>, %arg6: memref<1x16xf32, #tpu.memory_space<vmem>>, %arg7: memref<16x16xf32, #tpu.memory_space<vmem>>, %arg8: memref<16x32xf32, #tpu.memory_space<vmem>>) attributes {dimension_semantics = [#tpu.dimension_semantics<parallel>, #tpu.dimension_semantics<arbitrary>], iteration_bounds = array<i64: 1, 1>, scalar_prefetch = 0 : i64, scratch_operands = 1 : i64, tpu.core_type = #tpu.core_type<tc>, window_params = [{transform_indices = @transform_0, window_bounds = array<i64: 16, 32>}, {pipeline_mode = #tpu.pipeline_mode<synchronous>, transform_indices = @transform_1, window_bounds = array<i64: 1, 32>}, {pipeline_mode = #tpu.pipeline_mode<synchronous>, transform_indices = @transform_2, window_bounds = array<i64: 1, 32>}, {transform_indices = @transform_3, window_bounds = array<i64: 32, 16>}, {transform_indices = @transform_4, window_bounds = array<i64: 1, 16>}, {transform_indices = @transform_5, window_bounds = array<i64: 16, 16>}]} {
    %c0_i32 = arith.constant 0 : i32
    %0 = arith.cmpi eq, %arg1, %c0_i32 : i32
    %1 = arith.extui %0 : i1 to i32
    %c0_i32_0 = arith.constant 0 : i32
    %2 = arith.cmpi ne, %1, %c0_i32_0 : i32
    scf.if %2 {
      %c0_8 = arith.constant 0 : index
      %c0_9 = arith.constant 0 : index
      %10 = vector.load %arg2[%c0_8, %c0_9] : memref<16x32xf32, #tpu.memory_space<vmem>>, vector<16x32xf32>
      %cst_10 = arith.constant dense<0.000000e+00> : vector<16xf32>
      %11 = vector.multi_reduction <add>, %10, %cst_10 [1] : vector<16x32xf32> to vector<16xf32>
      %12 = vector.shape_cast %11 : vector<16xf32> to vector<16x1xf32>
      %13 = arith.mulf %10, %10 : vector<16x32xf32>
      %cst_11 = arith.constant dense<0.000000e+00> : vector<16xf32>
      %14 = vector.multi_reduction <add>, %13, %cst_11 [1] : vector<16x32xf32> to vector<16xf32>
      %15 = vector.shape_cast %14 : vector<16xf32> to vector<16x1xf32>
      %cst_12 = arith.constant 3.125000e-02 : f32
      %16 = vector.broadcast %cst_12 : f32 to vector<16x1xf32>
      %17 = arith.mulf %12, %16 : vector<16x1xf32>
      %cst_13 = arith.constant 3.125000e-02 : f32
      %18 = vector.broadcast %cst_13 : f32 to vector<16x1xf32>
      %19 = arith.mulf %15, %18 : vector<16x1xf32>
      %20 = arith.mulf %17, %17 : vector<16x1xf32>
      %21 = arith.subf %19, %20 : vector<16x1xf32>
      %cst_14 = arith.constant 0.000000e+00 : f32
      %22 = vector.broadcast %cst_14 : f32 to vector<16x1xf32>
      %23 = arith.maximumf %21, %22 : vector<16x1xf32>
      %cst_15 = arith.constant 9.99999974E-6 : f32
      %24 = vector.broadcast %cst_15 : f32 to vector<16x1xf32>
      %25 = arith.addf %23, %24 : vector<16x1xf32>
      %26 = math.rsqrt %25 : vector<16x1xf32>
      %27 = vector.broadcast %17 : vector<16x1xf32> to vector<16x32xf32>
      %28 = arith.subf %10, %27 : vector<16x32xf32>
      %29 = vector.broadcast %26 : vector<16x1xf32> to vector<16x32xf32>
      %30 = arith.mulf %28, %29 : vector<16x32xf32>
      %c0_16 = arith.constant 0 : index
      %c0_17 = arith.constant 0 : index
      %31 = vector.load %arg3[%c0_16, %c0_17] : memref<1x32xf32, #tpu.memory_space<vmem>>, vector<1x32xf32>
      %32 = vector.broadcast %31 : vector<1x32xf32> to vector<16x32xf32>
      %33 = arith.mulf %30, %32 : vector<16x32xf32>
      %c0_18 = arith.constant 0 : index
      %c0_19 = arith.constant 0 : index
      %34 = vector.load %arg4[%c0_18, %c0_19] : memref<1x32xf32, #tpu.memory_space<vmem>>, vector<1x32xf32>
      %35 = vector.broadcast %34 : vector<1x32xf32> to vector<16x32xf32>
      %36 = arith.addf %33, %35 : vector<16x32xf32>
      %cst_20 = arith.constant 0.000000e+00 : f32
      %37 = vector.broadcast %cst_20 : f32 to vector<16x32xf32>
      %38 = arith.maximumf %36, %37 : vector<16x32xf32>
      %c0_21 = arith.constant 0 : index
      %c0_22 = arith.constant 0 : index
      %39 = vector.load %arg8[%c0_21, %c0_22] : memref<16x32xf32, #tpu.memory_space<vmem>>, vector<16x32xf32>
      tpu.vector_store %arg8[%c0_21, %c0_22], %38 {strides = array<i32>} : memref<16x32xf32, #tpu.memory_space<vmem>>, vector<16x32xf32>,
    } else {
    }
    %c0 = arith.constant 0 : index
    %c0_1 = arith.constant 0 : index
    %3 = vector.load %arg8[%c0, %c0_1] : memref<16x32xf32, #tpu.memory_space<vmem>>, vector<16x32xf32>
    %c0_2 = arith.constant 0 : index
    %c0_3 = arith.constant 0 : index
    %4 = vector.load %arg5[%c0_2, %c0_3] : memref<32x16xf32, #tpu.memory_space<vmem>>, vector<32x16xf32>
    %cst = arith.constant dense<0.000000e+00> : vector<16x16xf32>
    %5 = tpu.matmul %3, %4, %cst {dimension_numbers = #tpu.dot_dimension_numbers<[1], [0], [0], [1], [0, 0, 1, 1], [], []>} : vector<16x32xf32>, vector<32x16xf32>, vector<16x16xf32> -> vector<16x16xf32>
    %c0_4 = arith.constant 0 : index
    %c0_5 = arith.constant 0 : index
    %6 = vector.load %arg6[%c0_4, %c0_5] : memref<1x16xf32, #tpu.memory_space<vmem>>, vector<1x16xf32>
    %7 = vector.broadcast %6 : vector<1x16xf32> to vector<16x16xf32>
    %8 = arith.addf %5, %7 : vector<16x16xf32>
    %c0_6 = arith.constant 0 : index
    %c0_7 = arith.constant 0 : index
    %9 = vector.load %arg7[%c0_6, %c0_7] : memref<16x16xf32, #tpu.memory_space<vmem>>, vector<16x16xf32>
    tpu.vector_store %arg7[%c0_6, %c0_7], %8 {strides = array<i32>} : memref<16x16xf32, #tpu.memory_space<vmem>>, vector<16x16xf32>,
    return
  }
  func.func @transform_0(%arg0: i32, %arg1: i32) -> (i32, i32) {
    %c0_i32 = arith.constant 0 : i32
    %c0_i32_0 = arith.constant 0 : i32
    return %arg0, %c0_i32 : i32, i32
  }
  func.func @transform_1(%arg0: i32, %arg1: i32) -> (i32, i32) {
    %c0_i32 = arith.constant 0 : i32
    %c0_i32_0 = arith.constant 0 : i32
    %c0_i32_1 = arith.constant 0 : i32
    return %c0_i32, %c0_i32_0 : i32, i32
  }
  func.func @transform_2(%arg0: i32, %arg1: i32) -> (i32, i32) {
    %c0_i32 = arith.constant 0 : i32
    %c0_i32_0 = arith.constant 0 : i32
    %c0_i32_1 = arith.constant 0 : i32
    return %c0_i32, %c0_i32_0 : i32, i32
  }
  func.func @transform_3(%arg0: i32, %arg1: i32) -> (i32, i32) {
    %c0_i32 = arith.constant 0 : i32
    %c0_i32_0 = arith.constant 0 : i32
    return %c0_i32, %arg1 : i32, i32
  }
  func.func @transform_4(%arg0: i32, %arg1: i32) -> (i32, i32) {
    %c0_i32 = arith.constant 0 : i32
    %c0_i32_0 = arith.constant 0 : i32
    return %c0_i32, %arg1 : i32, i32
  }
  func.func @transform_5(%arg0: i32, %arg1: i32) -> (i32, i32) {
    %c0_i32 = arith.constant 0 : i32
    return %arg0, %arg1 : i32, i32
  }
}

</mosaic_0001>

<llo_original>
// kernel: tpu_custom_call.1
$region0: #{tpu_custom_call.1}
  #allocation0 [shape = 'u32[]', space=smem, size = 0x4, offset = 0x4, fixed_abs, tag = 'smem constant byte address 0x4 - core index']
  #allocation1 [shape = 'u32[144,128]{1,0:T(1,128)}', space=vmem, size = 0x12000, scoped, tag = 'internal scratch']
  #allocation2 [shape = 'f32[16,32]{1,0:T(8,128)}', space=vmem, size = 0x2000, scoped, tag = 'scratch operand']
  %s0 = inlined_call_operand.vmem [shape: f32[16,32], index: 0, kind: input, shape index: {}]
  %s1 = inlined_call_operand.vmem [shape: f32[1,32], index: 1, kind: input, shape index: {}]
  %s2 = inlined_call_operand.vmem [shape: f32[1,32], index: 2, kind: input, shape index: {}]
  %s3 = inlined_call_operand.vmem [shape: f32[32,16], index: 3, kind: input, shape index: {}]
  %s4 = inlined_call_operand.vmem [shape: f32[1,16], index: 4, kind: input, shape index: {}]
  %s5 = inlined_call_operand.hbm [shape: f32[16,16], index: 5, kind: output, shape index: {}]
  %s6 = sld [smem:[#allocation0]]
  $region34: #{tpu_custom_call.1} parent=0
    _
  %s8 = ssub.s32 1, %s6
  %s9 = scalar_select 0, %s8, %s6
  $region1: #{tpu_custom_call.1} parent=0
    #allocation3 [shape = 'u8[8192]{0}', space=vmem, size = 0x2000, scoped, tag = 'output window, operand 0, single buffered']
    #allocation4 [shape = 's32[1]{0}', space=sflag, size = 0x4, scoped, tag = 'scoped memory for tpu_custom_call.1']
    %10 = vsyncpa [#allocation4], 0
    // Predicated region
    $region2: #{tpu_custom_call.1} parent=1 // pred_check
      _
    $region3: #{tpu_custom_call.1} parent=1 // pred_check_branch
      %12 = sbr.rel (0) target = $region5
    $region4: #{tpu_custom_call.1} parent=1 // pred_region
      _
    $region5: #{tpu_custom_call.1} parent=1 // pred_fallthru
      _
    // Predicated region
    $region6: #{tpu_custom_call.1} parent=1 // pred_check
      _
    $region7: #{tpu_custom_call.1} parent=1 // pred_check_branch
      %14 = sbr.rel (0) target = $region9
    $region8: #{tpu_custom_call.1} parent=1 // pred_region
      _
    $region9: #{tpu_custom_call.1} parent=1 // pred_fallthru
      _
    // Predicated region
    $region10: #{tpu_custom_call.1} parent=1 // pred_check
      _
    $region11: #{tpu_custom_call.1} parent=1 // pred_check_branch
      %16 = sbr.rel (0) target = $region13
    $region12: #{tpu_custom_call.1} parent=1 // pred_region
      _
    $region13: #{tpu_custom_call.1} parent=1 // pred_fallthru
      _
    // Predicated region
    $region14: #{tpu_custom_call.1} parent=1 // pred_check
      _
    $region15: #{tpu_custom_call.1} parent=1 // pred_check_branch
      %18 = sbr.rel (0) target = $region17
    $region16: #{tpu_custom_call.1} parent=1 // pred_region
      _
    $region17: #{tpu_custom_call.1} parent=1 // pred_fallthru
      _
    // Predicated region
    $region18: #{tpu_custom_call.1} parent=1 // pred_check
      _
    $region19: #{tpu_custom_call.1} parent=1 // pred_check_branch
      %20 = sbr.rel (0) target = $region21
    $region20: #{tpu_custom_call.1} parent=1 // pred_region
      _
    $region21: #{tpu_custom_call.1} parent=1 // pred_fallthru
      _
    %p21 = scmp.eq.s32.totalorder 0, 0
    // Predicated region
    $region22: #{tpu_custom_call.1} parent=1 // pred_check
      %p22 = pneg %p21
    $region23: #{tpu_custom_call.1} parent=1 // pred_check_branch
      %24 = sbr.rel (%p22) target = $region25
    $region24: #{tpu_custom_call.1} parent=1 // pred_region
      %v25 = vld [vmem:[%s0] sm:$0xff]
      %v26 = vld [vmem:[%s0 + $0x8] sm:$0xff]
      %vm27 = vcmask 261120
      %v28 = vsel %vm27, %v25, 0.0
      %29 = vadd.xlane.f32.xlu0 %v28
      %v30 = vpop.xlane.xlu0 %29
      %v31 = vsel %vm27, %v26, 0.0
      %32 = vadd.xlane.f32.xlu0 %v31
      %v33 = vpop.xlane.xlu0 %32
      %v34 = vmul.f32 %v25, %v25
      %v35 = vmul.f32 %v26, %v26
      %v36 = vsel %vm27, %v34, 0.0
      %37 = vadd.xlane.f32.xlu0 %v36
      %v38 = vpop.xlane.xlu0 %37
      %v39 = vsel %vm27, %v35, 0.0
      %40 = vadd.xlane.f32.xlu0 %v39
      %v41 = vpop.xlane.xlu0 %40
      %v42 = vmul.f32 %v30, 0.03125
      %v43 = vmul.f32 %v33, 0.03125
      %v44 = vmul.f32 %v38, 0.03125
      %v45 = vmul.f32 %v41, 0.03125
      %v46 = vmul.f32 %v42, %v42
      %v47 = vmul.f32 %v43, %v43
      %v48 = vsub.f32 %v44, %v46
      %v49 = vsub.f32 %v45, %v47
      %v50 = vmax.f32 %v48, 0.0
      %v51 = vmax.f32 %v49, 0.0
      %v52 = vadd.f32 %v50, 1e-05
      %v53 = vadd.f32 %v51, 1e-05
      %v54 = vrsqrt.pop %v52
      %v55 = vrsqrt.pop %v53
      %v56 = vsub.f32 %v25, %v42
      %v57 = vsub.f32 %v26, %v43
      %v58 = vmul.f32 %v56, %v54
      %v59 = vmul.f32 %v57, %v55
      %v60 = vld [vmem:[%s1] sm:$0x1]
      %v62 = vlaneseq
      %v63 = vshrl.u32 %v62, 7
      %v64 = vsub.s32 0, %v63
      %v65 = vrot.slane %v60, %v64
      %v67 = vmul.f32 %v58, %v65
      %v68 = vmul.f32 %v59, %v65
      %v69 = vld [vmem:[%s2] sm:$0x1]
      %v71 = vlaneseq
      %v72 = vshrl.u32 %v71, 7
      %v73 = vsub.s32 0, %v72
      %v74 = vrot.slane %v69, %v73
      %v76 = vadd.f32 %v67, %v74
      %v77 = vadd.f32 %v68, %v74
      %v78 = vmax.f32 %v76, 0.0
      %v79 = vmax.f32 %v77, 0.0
      %80 = vst.msk [vmem:[#allocation2] sm:$0xff] %vm27, %v78
      %81 = vst.msk [vmem:[#allocation2 + $0x8] sm:$0xff] %vm27, %v79
    $region25: #{tpu_custom_call.1} parent=1 // pred_fallthru
      _
    %v82 = vld [vmem:[#allocation2] sm:$0xff]
    %v83 = vld [vmem:[#allocation2 + $0x8] sm:$0xff]
    %v84 = vld [vmem:[%s3] sm:$0xff]
    %v85 = vld [vmem:[%s3 + $0x8] sm:$0xff]
    %v86 = vld [vmem:[%s3 + $0x10] sm:$0xff]
    %v87 = vld [vmem:[%s3 + $0x18] sm:$0xff]
    %v88 = vld [vmem:[%s4] sm:$0x1]
    %v90 = vlaneseq
    %v91 = vshrl.u32 %v90, 7
    %v92 = vsub.s32 0, %v91
    %v93 = vrot.slane %v88, %v92
    %vm95 = vcmask 261120
    %v97 = vsel %vm95, %v82, 0
    %v100 = vsel %vm95, %v83, 0
    %102 = vmatprep.subr.mxu0 0.0
    %103 = vmatpush1.msra.mxu0 0.0
    %104 = vmatprep.subr.mxu0 0.0
    %105 = vmatpush1.msra.mxu0 0.0
    %106 = vmatprep.subr.mxu0 0.0
    %107 = vmatpush1.msra.mxu0 0.0
    %108 = vmatprep.subr.mxu0 0.0
    %109 = vmatpush1.msra.mxu0 0.0
    %110 = vmatprep.subr.mxu0 0.0
    %111 = vmatpush1.msra.mxu0 0.0
    %112 = vmatprep.subr.mxu0 0.0
    %113 = vmatpush1.msra.mxu0 0.0
    %114 = vmatprep.subr.mxu0 0.0
    %115 = vmatpush1.msra.mxu0 0.0
    %116 = vmatprep.subr.mxu0 0.0
    %117 = vmatpush1.msra.mxu0 0.0
    %118 = vmatprep.subr.mxu0 0.0
    %119 = vmatpush1.msra.mxu0 0.0
    %120 = vmatprep.subr.mxu0 0.0
    %121 = vmatpush1.msra.mxu0 0.0
    %122 = vmatprep.subr.mxu0 0.0
    %123 = vmatpush1.msra.mxu0 0.0
    %124 = vmatprep.subr.mxu0 0.0
    %125 = vmatpush1.msra.mxu0 0.0
    %126 = vmatprep.subr.mxu0 0.0
    %127 = vmatpush1.msra.mxu0 %v87
    %128 = vmatprep.subr.mxu0 0.0
    %129 = vmatpush1.msra.mxu0 %v86
    %130 = vmatprep.subr.mxu0 0.0
    %131 = vmatpush1.msra.mxu0 %v85
    %132 = vmatprep.subr.mxu0 0.0
    %133 = vmatpush1.msra.mxu0 %v84
    %134 = vmatprep.subr.mxu0 0.0
    %135 = vmatpush2.msra.mxu0 0.0
    %136 = vmatprep.subr.mxu0 0.0
    %137 = vmatpush2.msra.mxu0 0.0
    %138 = vmatprep.subr.mxu0 0.0
    %139 = vmatpush2.msra.mxu0 0.0
    %140 = vmatprep.subr.mxu0 0.0
    %141 = vmatpush2.msra.mxu0 0.0
    %142 = vmatprep.subr.mxu0 0.0
    %143 = vmatpush2.msra.mxu0 0.0
    %144 = vmatprep.subr.mxu0 0.0
    %145 = vmatpush2.msra.mxu0 0.0
    %146 = vmatprep.subr.mxu0 0.0
    %147 = vmatpush2.msra.mxu0 0.0
    %148 = vmatprep.subr.mxu0 0.0
    %149 = vmatpush2.msra.mxu0 0.0
    %150 = vmatprep.subr.mxu0 0.0
    %151 = vmatpush2.msra.mxu0 0.0
    %152 = vmatprep.subr.mxu0 0.0
    %153 = vmatpush2.msra.mxu0 0.0
    %154 = vmatprep.subr.mxu0 0.0
    %155 = vmatpush2.msra.mxu0 0.0
    %156 = vmatprep.subr.mxu0 0.0
    %157 = vmatpush2.msra.mxu0 0.0
    %158 = vmatprep.subr.mxu0 0.0
    %159 = vmatpush2.msra.mxu0 0.0
    %160 = vmatprep.subr.mxu0 0.0
    %161 = vmatpush2.msra.mxu0 0.0
    %162 = vmatprep.subr.mxu0 0.0
    %163 = vmatpush2.msra.mxu0 0.0
    %164 = vmatprep.subr.mxu0 0.0
    %165 = vmatpush2.msra.mxu0 0.0
    %166 = vmatprep.mubr.f32.mxu0 0.0
    %167 = vmatmul.mubr.f32.gmra.mxu0 %v97
    %v168 = vpop.f32.mrf.mxu0
    %v169 = vadd.f32 %v93, %v168
    %v170 = vpop.f32.mrf.mxu0
    %171 = vmatprep.mubr.f32.mxu0 0.0
    %172 = vmatmul.mubr.f32.gmra.mxu0 %v100
    %v173 = vpop.f32.mrf.mxu0
    %v174 = vadd.f32 %v93, %v173
    %v175 = vpop.f32.mrf.mxu0
    %176 = vdwg.mxu0
    %vm177 = vcmask 130048
    %178 = vst.msk [vmem:[#allocation3] sm:$0xff] %vm177, %v169
    %179 = vst.msk [vmem:[#allocation3 + $0x8] sm:$0xff] %vm177, %v174
    // Predicated region
    $region26: #{tpu_custom_call.1} parent=1 // pred_check
      _
    $region27: #{tpu_custom_call.1} parent=1 // pred_check_branch
      %181 = sbr.rel (0) target = $region29
    $region28: #{tpu_custom_call.1} parent=1 // pred_region
      %s183 = ssub.s32 256, 256
      %184 = vsyncadd [#allocation4], %s183
      %s185 = sshll.u32 [#allocation3], 4
      %s186 = int_to_ptr.vmem [resolvable:$true] %s185
      %191 = dma.vmem_to_hbm [thread:$0]  %s186, 256, %s5, [#allocation4], 128, 128, 8
    $region29: #{tpu_custom_call.1} parent=1 // pred_fallthru
      _
    // Predicated region
    $region30: #{tpu_custom_call.1} parent=1 // pred_check
      _
    $region31: #{tpu_custom_call.1} parent=1 // pred_check_branch
      %193 = sbr.rel (0) target = $region33
    $region32: #{tpu_custom_call.1} parent=1 // pred_region
      %194 = dma.done [#allocation4], 256
    $region33: #{tpu_custom_call.1} parent=1 // pred_fallthru
      _
    %195 = vsyncpa [#allocation4], 1

</llo_original>
